<compile_context>
chip_gen: v5e
topology: v5e:2x2
jax: 0.10.0
libtpu: 0.0.40
codegen_flags: <defaults>
</compile_context>

<pallas_src>
import functools
import math
from typing import NamedTuple, Optional

import jax
import jax.numpy as jnp
from jax.experimental import pallas as pl
from jax.experimental.pallas import tpu as pltpu

HIDDEN1 = 32
HIDDEN2 = 16


def _round_up(x, m):
    return ((x + m - 1) // m) * m


def _vmem_limit_bytes():
    """Per-generation VMEM budget (v7x: 64 MiB physical, v5e/v6e: 128 MiB)."""
    cap = 64 * 1024 * 1024                      # conservative fallback (v7x)
    try:
        info = pltpu.get_tpu_info()
        cap = int(getattr(info, "vmem_capacity_bytes", cap))
    except Exception:
        pass
    return min(int(cap * 0.7), 100 * 1024 * 1024)


class Plan(NamedTuple):
    mode: str                 # "fused" | "tiled"
    n_pad: int
    tm: Optional[int]
    tk: Optional[int]
    vmem_limit: int


def make_plan(num_nodes, *, force_tiled=False, tm=512, tk=1024):
    """Decide fused vs. tiled execution and the padded node count."""
    vmem_limit = _vmem_limit_bytes()
    n8 = _round_up(num_nodes, 8)
    # Conservative fused footprint: (possibly double-buffered) bf16 A plus
    # lane-padded residents / f32 intermediates (~4.5 KiB per row).
    fused_bytes = 4 * n8 * n8 + 4608 * n8
    if not force_tiled and fused_bytes <= int(0.8 * vmem_limit):
        return Plan("fused", n8, None, None, vmem_limit)
    step = math.lcm(tm, tk)
    return Plan("tiled", _round_up(num_nodes, step), tm, tk, vmem_limit)


# ---------------------------------------------------------------------------
# Fused kernel (A resident in VMEM, read from HBM once):
#   out = wfc^T @ relu(A @ relu(A @ XW1 + b1) @ W2 + b2)^T + bfc  -> (1, N_pad)
# ---------------------------------------------------------------------------
def gcn_fused_kernel(a_ref, xw1_ref, b1_ref, w2_ref, b2_ref, wfc_ref, bfc_ref,
                     out_ref):
    a = a_ref[...]
    h1 = jnp.dot(a, xw1_ref[...], preferred_element_type=jnp.float32) + b1_ref[...]
    h1 = jnp.maximum(h1, 0.0)
    xw2 = jnp.dot(h1.astype(jnp.bfloat16), w2_ref[...],
                  preferred_element_type=jnp.float32)
    h2 = jnp.dot(a, xw2.astype(jnp.bfloat16),
                 preferred_element_type=jnp.float32) + b2_ref[...]
    h2 = jnp.maximum(h2, 0.0)
    # (1, 16) x (N_pad, 16)^T -> (1, N_pad): node axis lands on lanes.
    y = jax.lax.dot_general(
        wfc_ref[...], h2.astype(jnp.bfloat16),
        dimension_numbers=(((1,), (1,)), ((), ())),
        preferred_element_type=jnp.float32)
    out_ref[...] = y + bfc_ref[0]


# ---------------------------------------------------------------------------
# Tiled kernel 1: XW2 = relu(A @ XW1 + b1) @ W2
#   grid = (row_tiles, K_tiles); f32 accumulator over K in VMEM scratch.
# ---------------------------------------------------------------------------
def gcn_layer1_kernel(a_ref, xw1_ref, b1_ref, w2_ref, xw2_ref, acc_ref):
    k = pl.program_id(1)

    @pl.when(k == 0)
    def _():
        acc_ref[...] = jnp.zeros_like(acc_ref)

    acc_ref[...] += jnp.dot(a_ref[...], xw1_ref[...],
                            preferred_element_type=jnp.float32)

    @pl.when(k == pl.num_programs(1) - 1)
    def _():
        h1 = jnp.maximum(acc_ref[...] + b1_ref[...], 0.0)
        xw2_ref[...] = jnp.dot(h1.astype(jnp.bfloat16), w2_ref[...],
                               preferred_element_type=jnp.float32
                               ).astype(xw2_ref.dtype)


# ---------------------------------------------------------------------------
# Tiled kernel 2: out_row = wfc^T @ relu(A @ XW2 + b2)^T + bfc  -> (1, TM)
# ---------------------------------------------------------------------------
def gcn_layer2_kernel(a_ref, xw2_ref, b2_ref, wfc_ref, bfc_ref, out_ref, acc_ref):
    k = pl.program_id(1)

    @pl.when(k == 0)
    def _():
        acc_ref[...] = jnp.zeros_like(acc_ref)

    acc_ref[...] += jnp.dot(a_ref[...], xw2_ref[...],
                            preferred_element_type=jnp.float32)

    @pl.when(k == pl.num_programs(1) - 1)
    def _():
        h2 = jnp.maximum(acc_ref[...] + b2_ref[...], 0.0)
        y = jax.lax.dot_general(
            wfc_ref[...], h2.astype(jnp.bfloat16),
            dimension_numbers=(((1,), (1,)), ((), ())),
            preferred_element_type=jnp.float32)
        out_ref[...] = y + bfc_ref[0]


# ---------------------------------------------------------------------------
# Glue (stays in XLA): dense normalized adjacency, params, wrapper
# ---------------------------------------------------------------------------
def build_norm_adj(edge_index, num_nodes):
    """Dense D^{-1/2}(A+I)D^{-1/2} matching PyG GCNConv (self-loops, sym norm)."""
    src, dst = edge_index[0], edge_index[1]
    loop = jnp.arange(num_nodes, dtype=edge_index.dtype)
    src = jnp.concatenate([src, loop])
    dst = jnp.concatenate([dst, loop])
    a = jnp.zeros((num_nodes, num_nodes), jnp.float32).at[dst, src].add(1.0)
    deg = a.sum(axis=1)
    dinv = jnp.where(deg > 0, 1.0 / jnp.sqrt(deg), 0.0)
    return dinv[:, None] * a * dinv[None, :]


def prepare_adjacency(edge_index, num_nodes, n_pad):
    """Built ONCE per static graph (hoisted out of the jitted forward):
    normalized adjacency, zero-padded to (n_pad, n_pad), cast to bf16."""
    # TODO(synk): on v5e/v6e an int8-with-scale A (fp8 e4m3 on v7x) would halve
    # the dominant O(N^2) HBM traffic; kept bf16 here for accuracy/simplicity.
    # TODO(synk): for genuinely sparse large graphs, replace the dense O(N^2)
    # A_hat with a scalar-prefetch / row-gather formulation.
    a = build_norm_adj(edge_index, num_nodes)
    pad = n_pad - num_nodes
    return jnp.pad(a, ((0, pad), (0, pad))).astype(jnp.bfloat16)


def init_params(key, input_dim):
    k1, k2, k3 = jax.random.split(key, 3)

    def glorot(k, fan_in, fan_out):
        lim = (6.0 / (fan_in + fan_out)) ** 0.5
        return jax.random.uniform(k, (fan_in, fan_out), jnp.float32, -lim, lim)

    w1 = glorot(k1, input_dim, HIDDEN1)
    b1 = jnp.zeros((1, HIDDEN1), jnp.float32)
    w2 = glorot(k2, HIDDEN1, HIDDEN2)
    b2 = jnp.zeros((1, HIDDEN2), jnp.float32)
    wfc = glorot(k3, HIDDEN2, 1)
    bfc = jnp.zeros((1,), jnp.float32)
    return w1, b1, w2, b2, wfc, bfc


def gcn_forward(x, a_hat, params, *, plan):
    """x: (N, F_in) f32; a_hat: padded bf16 adjacency from prepare_adjacency."""
    n, _ = x.shape
    n_pad = plan.n_pad
    assert a_hat.shape == (n_pad, n_pad)
    pad = n_pad - n
    w1, b1, w2, b2, wfc, bfc = params

    # Row-local feature transform precomputed outside the kernels (same MXU
    # cost, removes the per-tile (TM,4)@(4,32) matmul + f32->bf16 cast).
    xw1 = jnp.pad(x @ w1, ((0, pad), (0, 0))).astype(jnp.bfloat16)  # (n_pad, 32)
    w2_bf = w2.astype(jnp.bfloat16)
    wfc_t = wfc.T.astype(jnp.bfloat16)                              # (1, 16)

    # NOTE on padding correctness: padded rows of XW1 are zero, so the layer-1
    # output on padded rows equals relu(b1) @ W2 (non-zero).  Those rows are
    # nullified by the zero padded COLUMNS of A_hat for every valid row, and
    # padded output entries are sliced off below.  Do not change the padding /
    # final slicing without re-checking this invariant.

    if plan.mode == "fused":
        cparams = pltpu.CompilerParams(
            dimension_semantics=("arbitrary",),
            vmem_limit_bytes=plan.vmem_limit)
        cost = pl.CostEstimate(
            flops=2 * n_pad * n_pad * (HIDDEN1 + HIDDEN2)
                  + 2 * n_pad * HIDDEN1 * HIDDEN2 + 2 * n_pad * HIDDEN2,
            transcendentals=0,
            bytes_accessed=2 * n_pad * n_pad + 2 * n_pad * HIDDEN1 + 4 * n_pad)
        out = pl.pallas_call(
            gcn_fused_kernel,
            out_shape=jax.ShapeDtypeStruct((1, n_pad), jnp.float32),
            grid=(1,),
            in_specs=[
                pl.BlockSpec((n_pad, n_pad), lambda i: (0, 0)),        # A (read once)
                pl.BlockSpec((n_pad, HIDDEN1), lambda i: (0, 0)),      # X @ W1
                pl.BlockSpec((1, HIDDEN1), lambda i: (0, 0)),          # b1
                pl.BlockSpec((HIDDEN1, HIDDEN2), lambda i: (0, 0)),    # W2
                pl.BlockSpec((1, HIDDEN2), lambda i: (0, 0)),          # b2
                pl.BlockSpec((1, HIDDEN2), lambda i: (0, 0)),          # wfc^T
                pl.BlockSpec(memory_space=pltpu.MemorySpace.SMEM),     # bfc scalar
            ],
            out_specs=pl.BlockSpec((1, n_pad), lambda i: (0, 0)),
            compiler_params=cparams,
            cost_estimate=cost,
        )(a_hat, xw1, b1, w2_bf, b2, wfc_t, bfc)
        return out[0, :n]                                 # .squeeze(): -> [N]

    # ----------------- tiled two-call path (large N) ------------------------
    tm, tk = plan.tm, plan.tk
    assert n_pad % tm == 0 and n_pad % tk == 0
    grid = (n_pad // tm, n_pad // tk)      # (rows: parallel, K: arbitrary/last)
    cparams = pltpu.CompilerParams(
        dimension_semantics=("parallel", "arbitrary"),
        vmem_limit_bytes=plan.vmem_limit)

    # ---- call 1: XW2 = relu(A @ XW1 + b1) @ W2 ------------------------------
    cost1 = pl.CostEstimate(
        flops=2 * n_pad * n_pad * HIDDEN1 + 2 * n_pad * HIDDEN1 * HIDDEN2,
        transcendentals=0,
        bytes_accessed=2 * n_pad * n_pad
                       + 2 * n_pad * HIDDEN1 * (n_pad // tm)
                       + 2 * n_pad * HIDDEN2)
    xw2 = pl.pallas_call(
        gcn_layer1_kernel,
        out_shape=jax.ShapeDtypeStruct((n_pad, HIDDEN2), jnp.bfloat16),
        grid=grid,
        in_specs=[
            pl.BlockSpec((tm, tk), lambda i, k: (i, k)),            # A tile
            pl.BlockSpec((tk, HIDDEN1), lambda i, k: (k, 0)),       # X@W1 K-slice
            pl.BlockSpec((1, HIDDEN1), lambda i, k: (0, 0)),        # b1
            pl.BlockSpec((HIDDEN1, HIDDEN2), lambda i, k: (0, 0)),  # W2
        ],
        out_specs=pl.BlockSpec((tm, HIDDEN2), lambda i, k: (i, 0)),
        scratch_shapes=[pltpu.VMEM((tm, HIDDEN1), jnp.float32)],
        compiler_params=cparams,
        cost_estimate=cost1,
    )(a_hat, xw1, b1, w2_bf)

    # ---- call 2: out = relu(A @ XW2 + b2) @ wfc + bfc  (lane-dense (1, N)) --
    cost2 = pl.CostEstimate(
        flops=2 * n_pad * n_pad * HIDDEN2 + 2 * n_pad * HIDDEN2,
        transcendentals=0,
        bytes_accessed=2 * n_pad * n_pad
                       + 2 * n_pad * HIDDEN2 * (n_pad // tm)
                       + 4 * n_pad)
    out = pl.pallas_call(
        gcn_layer2_kernel,
        out_shape=jax.ShapeDtypeStruct((1, n_pad), jnp.float32),
        grid=grid,
        in_specs=[
            pl.BlockSpec((tm, tk), lambda i, k: (i, k)),            # A tile
            pl.BlockSpec((tk, HIDDEN2), lambda i, k: (k, 0)),       # XW2 K-slice
            pl.BlockSpec((1, HIDDEN2), lambda i, k: (0, 0)),        # b2
            pl.BlockSpec((1, HIDDEN2), lambda i, k: (0, 0)),        # wfc^T
            pl.BlockSpec(memory_space=pltpu.MemorySpace.SMEM),      # bfc scalar
        ],
        out_specs=pl.BlockSpec((1, tm), lambda i, k: (0, i)),
        scratch_shapes=[pltpu.VMEM((tm, HIDDEN2), jnp.float32)],
        compiler_params=cparams,
        cost_estimate=cost2,
    )(a_hat, xw2, b2, wfc_t, bfc)

    return out[0, :n]                                     # .squeeze(): -> [N]


def gcn_reference(x, edge_index, params):
    """Plain-JAX f32 reference (same math as the PyTorch module)."""
    w1, b1, w2, b2, wfc, bfc = params
    a = build_norm_adj(edge_index, x.shape[0])
    h1 = jax.nn.relu(a @ (x @ w1) + b1)
    h2 = jax.nn.relu(a @ (h1 @ w2) + b2)
    return (h2 @ wfc + bfc[None, :])[:, 0]


def ring_edges(num_nodes):
    """Deterministic bidirectional ring graph, COO edge_index [2, 2*N]."""
    idx = jnp.arange(num_nodes, dtype=jnp.int32)
    nxt = (idx + 1) % num_nodes
    return jnp.stack([jnp.concatenate([idx, nxt]),
                      jnp.concatenate([nxt, idx])])


if __name__ == "__main__":
    key = jax.random.PRNGKey(0)
    k_x1, k_x2, k_p = jax.random.split(key, 3)

    input_dim = 4
    params = init_params(k_p, input_dim)

    # ---- test 1: small graph -> fused single-pass kernel --------------------
    n1 = 8
    x1 = jax.random.normal(k_x1, (n1, input_dim), jnp.float32)
    ei1 = ring_edges(n1)                                    # [2, 16]
    plan1 = make_plan(n1)
    a1 = prepare_adjacency(ei1, n1, plan1.n_pad)            # built once (static graph)
    fwd1 = jax.jit(functools.partial(gcn_forward, plan=plan1))
    out1 = jax.block_until_ready(fwd1(x1, a1, params))
    assert out1.shape == (n1,)
    ref1 = gcn_reference(x1, ei1, params)
    assert jnp.allclose(out1, ref1, rtol=1e-1, atol=5e-2), (out1, ref1)

    # ---- test 2: larger graph, force the K-tiled two-call path --------------
    n2 = 300
    x2 = jax.random.normal(k_x2, (n2, input_dim), jnp.float32)
    ei2 = ring_edges(n2)
    plan2 = make_plan(n2, force_tiled=True, tm=128, tk=128)
    a2 = prepare_adjacency(ei2, n2, plan2.n_pad)
    fwd2 = jax.jit(functools.partial(gcn_forward, plan=plan2))
    out2 = jax.block_until_ready(fwd2(x2, a2, params))
    assert out2.shape == (n2,)
    ref2 = gcn_reference(x2, ei2, params)
    assert jnp.allclose(out2, ref2, rtol=1e-1, atol=5e-2), (out2, ref2)

    print("KERNEL_OK")
</pallas_src>

<mosaic_0001>
module attributes {stable_mosaic.version = 11 : i64} {
  func.func @gcn_fused_kernel(%arg0: i32, %arg1: memref<8x8xbf16, #tpu.memory_space<vmem>>, %arg2: memref<8x32xbf16, #tpu.memory_space<vmem>>, %arg3: memref<1x32xf32, #tpu.memory_space<vmem>>, %arg4: memref<32x16xbf16, #tpu.memory_space<vmem>>, %arg5: memref<1x16xf32, #tpu.memory_space<vmem>>, %arg6: memref<1x16xbf16, #tpu.memory_space<vmem>>, %arg7: memref<1xf32, #tpu.memory_space<smem>>, %arg8: memref<1x8xf32, #tpu.memory_space<vmem>>) attributes {dimension_semantics = [#tpu.dimension_semantics<arbitrary>], iteration_bounds = array<i64: 1>, scalar_prefetch = 0 : i64, scratch_operands = 0 : i64, tpu.core_type = #tpu.core_type<tc>, window_params = [{pipeline_mode = #tpu.pipeline_mode<synchronous>, transform_indices = @transform_0, window_bounds = array<i64: 8, 8>}, {pipeline_mode = #tpu.pipeline_mode<synchronous>, transform_indices = @transform_1, window_bounds = array<i64: 8, 32>}, {pipeline_mode = #tpu.pipeline_mode<synchronous>, transform_indices = @transform_2, window_bounds = array<i64: 1, 32>}, {pipeline_mode = #tpu.pipeline_mode<synchronous>, transform_indices = @transform_3, window_bounds = array<i64: 32, 16>}, {pipeline_mode = #tpu.pipeline_mode<synchronous>, transform_indices = @transform_4, window_bounds = array<i64: 1, 16>}, {pipeline_mode = #tpu.pipeline_mode<synchronous>, transform_indices = @transform_5, window_bounds = array<i64: 1, 16>}, {transform_indices = @transform_6, window_bounds = array<i64: 1>}, {pipeline_mode = #tpu.pipeline_mode<synchronous>, transform_indices = @transform_7, window_bounds = array<i64: 1, 8>}]} {
    %c0 = arith.constant 0 : index
    %c0_0 = arith.constant 0 : index
    %0 = vector.load %arg1[%c0, %c0_0] : memref<8x8xbf16, #tpu.memory_space<vmem>>, vector<8x8xbf16>
    %c0_1 = arith.constant 0 : index
    %c0_2 = arith.constant 0 : index
    %1 = vector.load %arg2[%c0_1, %c0_2] : memref<8x32xbf16, #tpu.memory_space<vmem>>, vector<8x32xbf16>
    %cst = arith.constant dense<0.000000e+00> : vector<8x32xf32>
    %2 = tpu.matmul %0, %1, %cst {dimension_numbers = #tpu.dot_dimension_numbers<[1], [0], [0], [1], [0, 0, 1, 1], [], []>} : vector<8x8xbf16>, vector<8x32xbf16>, vector<8x32xf32> -> vector<8x32xf32>
    %c0_3 = arith.constant 0 : index
    %c0_4 = arith.constant 0 : index
    %3 = vector.load %arg3[%c0_3, %c0_4] : memref<1x32xf32, #tpu.memory_space<vmem>>, vector<1x32xf32>
    %4 = vector.broadcast %3 : vector<1x32xf32> to vector<8x32xf32>
    %5 = arith.addf %2, %4 : vector<8x32xf32>
    %cst_5 = arith.constant 0.000000e+00 : f32
    %6 = vector.broadcast %cst_5 : f32 to vector<8x32xf32>
    %7 = arith.maximumf %5, %6 : vector<8x32xf32>
    %8 = arith.truncf %7 : vector<8x32xf32> to vector<8x32xbf16>
    %c0_6 = arith.constant 0 : index
    %c0_7 = arith.constant 0 : index
    %9 = vector.load %arg4[%c0_6, %c0_7] : memref<32x16xbf16, #tpu.memory_space<vmem>>, vector<32x16xbf16>
    %cst_8 = arith.constant dense<0.000000e+00> : vector<8x16xf32>
    %10 = tpu.matmul %8, %9, %cst_8 {dimension_numbers = #tpu.dot_dimension_numbers<[1], [0], [0], [1], [0, 0, 1, 1], [], []>} : vector<8x32xbf16>, vector<32x16xbf16>, vector<8x16xf32> -> vector<8x16xf32>
    %11 = arith.truncf %10 : vector<8x16xf32> to vector<8x16xbf16>
    %cst_9 = arith.constant dense<0.000000e+00> : vector<8x16xf32>
    %12 = tpu.matmul %0, %11, %cst_9 {dimension_numbers = #tpu.dot_dimension_numbers<[1], [0], [0], [1], [0, 0, 1, 1], [], []>} : vector<8x8xbf16>, vector<8x16xbf16>, vector<8x16xf32> -> vector<8x16xf32>
    %c0_10 = arith.constant 0 : index
    %c0_11 = arith.constant 0 : index
    %13 = vector.load %arg5[%c0_10, %c0_11] : memref<1x16xf32, #tpu.memory_space<vmem>>, vector<1x16xf32>
    %14 = vector.broadcast %13 : vector<1x16xf32> to vector<8x16xf32>
    %15 = arith.addf %12, %14 : vector<8x16xf32>
    %cst_12 = arith.constant 0.000000e+00 : f32
    %16 = vector.broadcast %cst_12 : f32 to vector<8x16xf32>
    %17 = arith.maximumf %15, %16 : vector<8x16xf32>
    %c0_13 = arith.constant 0 : index
    %c0_14 = arith.constant 0 : index
    %18 = vector.load %arg6[%c0_13, %c0_14] : memref<1x16xbf16, #tpu.memory_space<vmem>>, vector<1x16xbf16>
    %19 = arith.truncf %17 : vector<8x16xf32> to vector<8x16xbf16>
    %cst_15 = arith.constant dense<0.000000e+00> : vector<1x8xf32>
    %20 = tpu.matmul %18, %19, %cst_15 {dimension_numbers = #tpu.dot_dimension_numbers<[1], [1], [0], [0], [0, 0, 1, 0], [], []>} : vector<1x16xbf16>, vector<8x16xbf16>, vector<1x8xf32> -> vector<1x8xf32>
    %c0_16 = arith.constant 0 : index
    %21 = memref.load %arg7[%c0_16] : memref<1xf32, #tpu.memory_space<smem>>
    %22 = vector.broadcast %21 : f32 to vector<1x8xf32>
    %23 = arith.addf %20, %22 : vector<1x8xf32>
    %c0_17 = arith.constant 0 : index
    %c0_18 = arith.constant 0 : index
    %24 = vector.load %arg8[%c0_17, %c0_18] : memref<1x8xf32, #tpu.memory_space<vmem>>, vector<1x8xf32>
    tpu.vector_store %arg8[%c0_17, %c0_18], %23 {strides = array<i32>} : memref<1x8xf32, #tpu.memory_space<vmem>>, vector<1x8xf32>,
    return
  }
  func.func @transform_0(%arg0: i32) -> (i32, i32) {
    %c0_i32 = arith.constant 0 : i32
    %c0_i32_0 = arith.constant 0 : i32
    %c0_i32_1 = arith.constant 0 : i32
    return %c0_i32, %c0_i32_0 : i32, i32
  }
  func.func @transform_1(%arg0: i32) -> (i32, i32) {
    %c0_i32 = arith.constant 0 : i32
    %c0_i32_0 = arith.constant 0 : i32
    %c0_i32_1 = arith.constant 0 : i32
    return %c0_i32, %c0_i32_0 : i32, i32
  }
  func.func @transform_2(%arg0: i32) -> (i32, i32) {
    %c0_i32 = arith.constant 0 : i32
    %c0_i32_0 = arith.constant 0 : i32
    %c0_i32_1 = arith.constant 0 : i32
    return %c0_i32, %c0_i32_0 : i32, i32
  }
  func.func @transform_3(%arg0: i32) -> (i32, i32) {
    %c0_i32 = arith.constant 0 : i32
    %c0_i32_0 = arith.constant 0 : i32
    %c0_i32_1 = arith.constant 0 : i32
    return %c0_i32, %c0_i32_0 : i32, i32
  }
  func.func @transform_4(%arg0: i32) -> (i32, i32) {
    %c0_i32 = arith.constant 0 : i32
    %c0_i32_0 = arith.constant 0 : i32
    %c0_i32_1 = arith.constant 0 : i32
    return %c0_i32, %c0_i32_0 : i32, i32
  }
  func.func @transform_5(%arg0: i32) -> (i32, i32) {
    %c0_i32 = arith.constant 0 : i32
    %c0_i32_0 = arith.constant 0 : i32
    %c0_i32_1 = arith.constant 0 : i32
    return %c0_i32, %c0_i32_0 : i32, i32
  }
  func.func @transform_6(%arg0: i32) -> i32 {
    %c0_i32 = arith.constant 0 : i32
    %c0_i32_0 = arith.constant 0 : i32
    return %c0_i32 : i32
  }
  func.func @transform_7(%arg0: i32) -> (i32, i32) {
    %c0_i32 = arith.constant 0 : i32
    %c0_i32_0 = arith.constant 0 : i32
    %c0_i32_1 = arith.constant 0 : i32
    return %c0_i32, %c0_i32_0 : i32, i32
  }
}

</mosaic_0001>

<llo_original>
// kernel: gcn_forward.1
$region0: #{gcn_forward.1}
  #allocation0 [shape = 'u32[]', space=smem, size = 0x4, offset = 0x4, fixed_abs, tag = 'smem constant byte address 0x4 - core index']
  #allocation1 [shape = 'u32[72,128]{1,0:T(1,128)}', space=vmem, size = 0x9000, scoped, tag = 'internal scratch']
  #allocation2 [shape = 'f32[1]{0:T(128)S(6)}', space=smem, size = 0x200, scoped, tag = 'scoped memory for gcn_forward.1']
  %s0 = inlined_call_operand.vmem [shape: bf16[8,8], index: 0, kind: input, shape index: {}]
  %s1 = inlined_call_operand.vmem [shape: bf16[8,32], index: 1, kind: input, shape index: {}]
  %s2 = inlined_call_operand.vmem [shape: f32[1,32], index: 2, kind: input, shape index: {}]
  %s3 = inlined_call_operand.vmem [shape: bf16[32,16], index: 3, kind: input, shape index: {}]
  %s4 = inlined_call_operand.vmem [shape: f32[1,16], index: 4, kind: input, shape index: {}]
  %s5 = inlined_call_operand.vmem [shape: bf16[1,16], index: 5, kind: input, shape index: {}]
  %s6 = inlined_call_operand.<no memory space> [shape: f32[1], index: 6, kind: input, shape index: {}]
  %s7 = inlined_call_operand.hbm [shape: f32[1,8], index: 7, kind: output, shape index: {}]
  %s8 = sld [smem:[#allocation0]]
  $region38: #{gcn_forward.1} parent=0
    _
  %s10 = ssub.s32 1, %s8
  %s11 = scalar_select 0, %s10, %s8
  %12 = sst [smem:[#allocation2]] %s6
  $region1: #{gcn_forward.1} parent=0
    #allocation3 [shape = 'u8[512]{0}', space=vmem, size = 0x400, scoped, tag = 'output window, operand 0, single buffered']
    #allocation4 [shape = 's32[1]{0}', space=sflag, size = 0x4, scoped, tag = 'scoped memory for gcn_forward.1']
    %13 = vsyncpa [#allocation4], 0
    // Predicated region
    $region2: #{gcn_forward.1} parent=1 // pred_check
      _
    $region3: #{gcn_forward.1} parent=1 // pred_check_branch
      %15 = sbr.rel (0) target = $region5
    $region4: #{gcn_forward.1} parent=1 // pred_region
      _
    $region5: #{gcn_forward.1} parent=1 // pred_fallthru
      _
    // Predicated region
    $region6: #{gcn_forward.1} parent=1 // pred_check
      _
    $region7: #{gcn_forward.1} parent=1 // pred_check_branch
      %17 = sbr.rel (0) target = $region9
    $region8: #{gcn_forward.1} parent=1 // pred_region
      _
    $region9: #{gcn_forward.1} parent=1 // pred_fallthru
      _
    // Predicated region
    $region10: #{gcn_forward.1} parent=1 // pred_check
      _
    $region11: #{gcn_forward.1} parent=1 // pred_check_branch
      %19 = sbr.rel (0) target = $region13
    $region12: #{gcn_forward.1} parent=1 // pred_region
      _
    $region13: #{gcn_forward.1} parent=1 // pred_fallthru
      _
    // Predicated region
    $region14: #{gcn_forward.1} parent=1 // pred_check
      _
    $region15: #{gcn_forward.1} parent=1 // pred_check_branch
      %21 = sbr.rel (0) target = $region17
    $region16: #{gcn_forward.1} parent=1 // pred_region
      _
    $region17: #{gcn_forward.1} parent=1 // pred_fallthru
      _
    // Predicated region
    $region18: #{gcn_forward.1} parent=1 // pred_check
      _
    $region19: #{gcn_forward.1} parent=1 // pred_check_branch
      %23 = sbr.rel (0) target = $region21
    $region20: #{gcn_forward.1} parent=1 // pred_region
      _
    $region21: #{gcn_forward.1} parent=1 // pred_fallthru
      _
    // Predicated region
    $region22: #{gcn_forward.1} parent=1 // pred_check
      _
    $region23: #{gcn_forward.1} parent=1 // pred_check_branch
      %25 = sbr.rel (0) target = $region25
    $region24: #{gcn_forward.1} parent=1 // pred_region
      _
    $region25: #{gcn_forward.1} parent=1 // pred_fallthru
      _
    // Predicated region
    $region26: #{gcn_forward.1} parent=1 // pred_check
      _
    $region27: #{gcn_forward.1} parent=1 // pred_check_branch
      %27 = sbr.rel (0) target = $region29
    $region28: #{gcn_forward.1} parent=1 // pred_region
      _
    $region29: #{gcn_forward.1} parent=1 // pred_fallthru
      _
    %v29 = vld [vmem:[%s0] sm:$0xf]
    %v30 = vld [vmem:[%s1] sm:$0xf]
    %v31 = vld [vmem:[%s2] sm:$0x1]
    %v33 = vperm.slane %v31, 0
    %vm35 = vcmask 64512
    %v37 = vsel %vm35, %v29, 0
    %vm39 = vcmask 1043456
    %v41 = vsel %vm39, %v30, 0
    %43 = vmatpush.bf16.msra.mxu0 0
    %44 = vmatpush.bf16.msra.mxu0 0
    %45 = vmatpush.bf16.msra.mxu0 0
    %46 = vmatpush.bf16.msra.mxu0 0
    %47 = vmatpush.bf16.msra.mxu0 0
    %48 = vmatpush.bf16.msra.mxu0 0
    %49 = vmatpush.bf16.msra.mxu0 0
    %50 = vmatpush.bf16.msra.mxu0 %v41
    %51 = vmatmul.bf16.gmra.mxu0 %v37
    %v52 = vpop.f32.mrf.mxu0
    %v53 = vadd.f32 %v33, %v52
    %v54 = vpop.f32.mrf.mxu0
    %55 = vdwg.mxu0
    %v56 = vmax.f32 %v53, 0.0
    %v57 = vpack.c.bf16 %v56, %v56
    %v58 = vld [vmem:[%s3] sm:$0xf]
    %v59 = vld [vmem:[%s3 + $0x4] sm:$0xf]
    %v60 = vld [vmem:[%s3 + $0x8] sm:$0xf]
    %v61 = vld [vmem:[%s3 + $0xc] sm:$0xf]
    %v66 = vunpack.c.l.b16 %v58
    %v67 = vunpack.c.l.b16 %v59
    %v68 = vunpack.c.l.b16 %v60
    %v69 = vunpack.c.l.b16 %v61
    %v70 = vpack.c.b16 %v67, %v66
    %v71 = vpack.c.b16 %v69, %v68
    %vm74 = vcmask 261120
    %v76 = vsel %vm74, %v57, 0
    %78 = vmatpush.bf16.msra.mxu0 0
    %79 = vmatpush.bf16.msra.mxu0 0
    %80 = vmatpush.bf16.msra.mxu0 0
    %81 = vmatpush.bf16.msra.mxu0 0
    %82 = vmatpush.bf16.msra.mxu0 0
    %83 = vmatpush.bf16.msra.mxu0 0
    %84 = vmatpush.bf16.msra.mxu0 %v71
    %85 = vmatpush.bf16.msra.mxu0 %v70
    %86 = vmatmul.bf16.gmra.mxu0 %v76
    %v87 = vpop.f32.mrf.mxu0
    %v88 = vadd.f32 0.0, %v87
    %v89 = vpop.f32.mrf.mxu0
    %90 = vdwg.mxu0
    %v91 = vpack.c.bf16 %v88, %v88
    %v92 = vld [vmem:[%s4] sm:$0x1]
    %v94 = vperm.slane %v92, 0
    %v97 = vsel %vm39, %v91, 0
    %99 = vmatpush.bf16.msra.mxu0 0
    %100 = vmatpush.bf16.msra.mxu0 0
    %101 = vmatpush.bf16.msra.mxu0 0
    %102 = vmatpush.bf16.msra.mxu0 0
    %103 = vmatpush.bf16.msra.mxu0 0
    %104 = vmatpush.bf16.msra.mxu0 0
    %105 = vmatpush.bf16.msra.mxu0 0
    %106 = vmatpush.bf16.msra.mxu0 %v97
    %107 = vmatmul.bf16.gmra.mxu0 %v37
    %v108 = vpop.f32.mrf.mxu0
    %v109 = vadd.f32 %v94, %v108
    %v110 = vpop.f32.mrf.mxu0
    %111 = vdwg.mxu0
    %v112 = vmax.f32 %v109, 0.0
    %v113 = vld [vmem:[%s5] sm:$0x1]
    %v114 = vpack.c.bf16 %v112, %v112
    %s115 = sld [smem:[#allocation2]]
    %v116 = vstv %s115
    %vm117 = vcmask 130048
    %v119 = vsel %vm117, %v113, 0
    %v122 = vsel %vm117, %v114, 0
    %124 = vmatpush.bf16.xpose.msra.mxu0 0
    %125 = vmatpush.bf16.xpose.msra.mxu0 0
    %126 = vmatpush.bf16.xpose.msra.mxu0 0
    %127 = vmatpush.bf16.xpose.msra.mxu0 0
    %128 = vmatpush.bf16.xpose.msra.mxu0 0
    %129 = vmatpush.bf16.xpose.msra.mxu0 0
    %130 = vmatpush.bf16.xpose.msra.mxu0 0
    %131 = vmatpush.bf16.xpose.msra.mxu0 %v122
    %132 = vmatmul.bf16.gmra.mxu0 %v119
    %v133 = vpop.f32.mrf.mxu0
    %v134 = vadd.f32 %v116, %v133
    %v135 = vpop.f32.mrf.mxu0
    %136 = vdwg.mxu0
    %vm137 = vcmask 57344
    %138 = vst.msk [vmem:[#allocation3] sm:$0x1] %vm137, %v134
    // Predicated region
    $region30: #{gcn_forward.1} parent=1 // pred_check
      _
    $region31: #{gcn_forward.1} parent=1 // pred_check_branch
      %140 = sbr.rel (0) target = $region33
    $region32: #{gcn_forward.1} parent=1 // pred_region
      %142 = vsyncadd [#allocation4], 0
      %s144 = sshll.u32 [#allocation3], 4
      %s145 = int_to_ptr.vmem [resolvable:$true] %s144
      %s146 = sshll.u32 %s7, 4
      %s147 = int_to_ptr.hbm [resolvable:$true] %s146
      %149 = dma.vmem_to_hbm [thread:$0]  %s145, 16, %s147, [#allocation4]
    $region33: #{gcn_forward.1} parent=1 // pred_fallthru
      _
    // Predicated region
    $region34: #{gcn_forward.1} parent=1 // pred_check
      _
    $region35: #{gcn_forward.1} parent=1 // pred_check_branch
      %151 = sbr.rel (0) target = $region37
    $region36: #{gcn_forward.1} parent=1 // pred_region
      %153 = dma.done [#allocation4], 16
    $region37: #{gcn_forward.1} parent=1 // pred_fallthru
      _
    %154 = vsyncpa [#allocation4], 1

</llo_original>
